<compile_context>
chip_gen: v7x
topology: tpu7x:2x2x1
jax: 0.10.0
libtpu: 0.0.40
codegen_flags: <defaults>
</compile_context>

<pallas_src>
import functools

import jax
import jax.numpy as jnp
from jax.experimental import pallas as pl
from jax.experimental.pallas import tpu as pltpu


def _round_up(x, m):
    return ((x + m - 1) // m) * m


_VMEM_CAP = None


def _vmem_capacity_bytes():
    """Per-TensorCore VMEM capacity; conservative fallback if unavailable."""
    global _VMEM_CAP
    if _VMEM_CAP is None:
        cap = None
        try:
            cap = getattr(pltpu.get_tpu_info(), "vmem_capacity_bytes", None)
        except Exception:
            cap = None
        # Fallback sized for v7x (64 MiB) — safe on every generation.
        _VMEM_CAP = int(cap) if cap else 64 * 1024 * 1024
    return _VMEM_CAP


def _largest_div_mult(n, cap, step):
    """Largest multiple of `step` that divides `n` and is <= cap (0 if none)."""
    t = (min(cap, n) // step) * step
    while t >= step:
        if n % t == 0:
            return t
        t -= step
    return 0


def _pick_tiles(M, OUT, H, x_bpe, w_bpe, out_bpe, vmem_cap):
    """Tile plan for the weight-bandwidth-bound classifier head.

    Returns (tm, tn, tk, weight_buffers, vmem_limit_bytes).
    """
    budget = int(vmem_cap * 0.70)  # headroom for compiler scratch / semaphores

    # --- N tile: lane-dense output stores, >=256 wide when possible ---------
    if OUT >= 512:
        tn = 512
    elif OUT >= 256:
        tn = 256
    else:
        tn = OUT  # block extent == full array dim is always legal

    # --- M tile: generation-aware cap (weight arithmetic intensity ~ tm) ----
    # 128 MiB-VMEM parts (v5e/v6e): push to 1024 for prefill; 64 MiB (v7x): 512.
    tm_cap = 1024 if vmem_cap >= (96 << 20) else 512
    tm = min(tm_cap, _round_up(M, 16))
    tm_floor = min(256, _round_up(M, 16))

    def working_set(tm_, tn_, tk_, w_bufs, ksplit):
        b = 2 * tm_ * tk_ * x_bpe            # x tile, double-buffered
        b += w_bufs * tk_ * tn_ * w_bpe      # weight stripe, w_bufs-buffered
        b += 2 * tm_ * tn_ * out_bpe         # output tile, double-buffered
        b += 2 * tn_ * 4                     # f32 bias tile
        if ksplit:
            b += tm_ * tn_ * 4               # f32 accumulator scratch
        return b

    # --- prefer the full-K path: shrink tm toward the decode floor first ----
    while working_set(tm, tn, H, 2, False) > budget and tm > tm_floor:
        tm = max(tm_floor, tm // 2)

    if working_set(tm, tn, H, 2, False) <= budget or H % 128 != 0:
        # Full reduction in one block (or H not lane-divisible: full-K forced;
        # the explicit vmem_limit below covers it).
        tk = H
    else:
        # Split K: largest multiple-of-128 divisor of H that fits the budget
        # (lane-aligned x last dim; divisor => padded K blocks can never
        # pollute the accumulator).  Never silently falls back to tk == H.
        fixed = working_set(tm, tn, 0, 2, True)
        per_k = 2 * (tm * x_bpe + tn * w_bpe)
        tk_cap = max(128, (budget - fixed) // max(per_k, 1))
        tk = (_largest_div_mult(H, tk_cap, 128)
              or _largest_div_mult(H, H, 128)
              or H)

    # --- v7x megacore guard: at decode give the j (OUT) axis >=2 blocks -----
    gi = pl.cdiv(M, tm)
    if gi == 1 and pl.cdiv(OUT, tn) == 1 and OUT >= 256:
        tn = max(128, _round_up(OUT // 2, 128))
    gj = pl.cdiv(OUT, tn)

    # --- deeper weight pipelining for decode's pure weight stream -----------
    w_bufs = 2
    if (tk == H and gi == 1 and gj >= 3
            and working_set(tm, tn, H, 3, False) <= budget):
        w_bufs = 3

    ksplit = tk != H
    vmem_limit = min(vmem_cap,
                     working_set(tm, tn, tk, w_bufs, ksplit) + (16 << 20))
    return tm, tn, tk, w_bufs, int(vmem_limit)


def _weight_block_spec(block_shape, index_map, buffers):
    """Weight BlockSpec, optionally with deeper pipelining (guarded)."""
    if buffers > 2 and hasattr(pl, "Buffered"):
        try:
            return pl.BlockSpec(block_shape, index_map,
                                pipeline_mode=pl.Buffered(buffers))
        except TypeError:
            pass
    return pl.BlockSpec(block_shape, index_map)


def _linear_bias_kernel(x_ref, w_ref, b_ref, o_ref, *, compute_dtype):
    """Full-K path: one plain MXU matmul per (i, j) output tile, no scratch.

    x tile: (tm, H) in the caller's dtype (cast on the VPU here);
    w tile: (H, tn) pre-transposed / pre-cast weight; bias: (1, tn) f32.
    """
    x = x_ref[...].astype(compute_dtype)
    w = w_ref[...].astype(compute_dtype)  # no-op when the weight is prepared
    acc = jnp.dot(x, w, preferred_element_type=jnp.float32)
    o_ref[...] = (acc + b_ref[...]).astype(o_ref.dtype)


def _linear_bias_kernel_ksplit(x_ref, w_ref, b_ref, o_ref, acc_ref, *,
                               compute_dtype):
    """K-split path (very large H): f32 accumulator across the reduction."""
    k = pl.program_id(2)

    @pl.when(k == 0)
    def _():
        acc_ref[...] = jnp.zeros_like(acc_ref)

    acc_ref[...] += jnp.dot(x_ref[...].astype(compute_dtype),
                            w_ref[...].astype(compute_dtype),
                            preferred_element_type=jnp.float32)

    @pl.when(k == pl.num_programs(2) - 1)
    def _():
        o_ref[...] = (acc_ref[...] + b_ref[...]).astype(o_ref.dtype)


def prepare_classifier1d_params(weight, bias, compute_dtype=jnp.bfloat16):
    """One-time parameter preparation (call OUTSIDE jit, once at init).

    weight: [OUT, H] (PyTorch nn.Linear layout), bias: [OUT].
    Returns (w_t [H, OUT] in compute_dtype, bias [1, OUT] f32).
    Casting + transposing here removes the per-call HBM cast copy of the
    largest tensor and guarantees a plain (non-transposed-RHS) MXU matmul.
    """
    w_t = jnp.asarray(weight).T.astype(compute_dtype)
    b2d = jnp.asarray(bias).astype(jnp.float32).reshape(1, -1)
    return w_t, b2d


@functools.partial(jax.jit, static_argnames=("compute_dtype",))
def classifier1d_forward(x, w_t, bias2d, *, compute_dtype=jnp.bfloat16):
    """y = x @ W^T + b (then identity broadcast/all-gather: single TP rank).

    x:      [B, S, H]   (any float dtype; cast to compute_dtype per-tile)
    w_t:    [H, OUT]    prepared by prepare_classifier1d_params
    bias2d: [1, OUT]    f32
    returns [B, S, OUT] in x.dtype.  Pass compute_dtype=jnp.float32 to keep
    the full-precision path of the original f32 nn.Linear.
    """
    B, S, H = x.shape
    H2, OUT = w_t.shape
    assert H2 == H, (H2, H)
    M = B * S
    out_dtype = x.dtype

    x2d = x.reshape(M, H)  # metadata-only reshape; no dtype cast at the boundary

    x_bpe = jnp.dtype(x2d.dtype).itemsize
    w_bpe = jnp.dtype(w_t.dtype).itemsize
    out_bpe = jnp.dtype(out_dtype).itemsize
    vmem_cap = _vmem_capacity_bytes()
    tm, tn, tk, w_bufs, vmem_limit = _pick_tiles(
        M, OUT, H, x_bpe, w_bpe, out_bpe, vmem_cap)

    if tk == H:
        # No reduction grid axis, no accumulator scratch.
        grid = (pl.cdiv(M, tm), pl.cdiv(OUT, tn))
        kernel = functools.partial(_linear_bias_kernel,
                                   compute_dtype=compute_dtype)
        out2d = pl.pallas_call(
            kernel,
            out_shape=jax.ShapeDtypeStruct((M, OUT), out_dtype),
            grid_spec=pltpu.PrefetchScalarGridSpec(
                num_scalar_prefetch=0,
                grid=grid,
                in_specs=[
                    pl.BlockSpec((tm, H), lambda i, j: (i, 0)),          # x
                    _weight_block_spec((H, tn), lambda i, j: (0, j),
                                       w_bufs),                           # W^T
                    pl.BlockSpec((1, tn), lambda i, j: (0, j)),          # bias
                ],
                out_specs=pl.BlockSpec((tm, tn), lambda i, j: (i, j)),
            ),
            compiler_params=pltpu.CompilerParams(
                dimension_semantics=("parallel", "parallel"),
                vmem_limit_bytes=vmem_limit,
            ),
        )(x2d, w_t, bias2d)
    else:
        # Very large H: split the reduction.  tk is a multiple-of-128 divisor
        # of H, so no padded K block can ever reach the accumulator.
        grid = (pl.cdiv(M, tm), pl.cdiv(OUT, tn), H // tk)
        kernel = functools.partial(_linear_bias_kernel_ksplit,
                                   compute_dtype=compute_dtype)
        out2d = pl.pallas_call(
            kernel,
            out_shape=jax.ShapeDtypeStruct((M, OUT), out_dtype),
            grid_spec=pltpu.PrefetchScalarGridSpec(
                num_scalar_prefetch=0,
                grid=grid,
                in_specs=[
                    pl.BlockSpec((tm, tk), lambda i, j, k: (i, k)),
                    pl.BlockSpec((tk, tn), lambda i, j, k: (k, j)),
                    pl.BlockSpec((1, tn), lambda i, j, k: (0, j)),
                ],
                out_specs=pl.BlockSpec((tm, tn), lambda i, j, k: (i, j)),
                scratch_shapes=[pltpu.VMEM((tm, tn), jnp.float32)],
            ),
            compiler_params=pltpu.CompilerParams(
                dimension_semantics=("parallel", "parallel", "arbitrary"),
                vmem_limit_bytes=vmem_limit,
            ),
        )(x2d, w_t, bias2d)

    # TODO(synk): tp._broad_cast / tp._all_gather are multi-device ICI
    # collectives; with split_k == 1 (no TP group) they are identities, which
    # is what is implemented here.
    return out2d.reshape(B, S, OUT)


if __name__ == "__main__":
    # Small shapes consistent with a classifier head: [B, S, H] -> [B, S, OUT]
    B, S, H, OUT = 2, 8, 32, 128

    key = jax.random.PRNGKey(0)
    kx, kw, kb = jax.random.split(key, 3)
    x = jax.random.normal(kx, (B, S, H), dtype=jnp.float32)
    # deterministic "Linear" parameters (PyTorch layout: weight [OUT, H])
    weight = jax.random.normal(kw, (OUT, H), dtype=jnp.float32) * 0.05
    bias = jax.random.normal(kb, (OUT,), dtype=jnp.float32) * 0.01

    # One-time parameter preparation outside jit: bf16 cast + [H, OUT] layout.
    w_t, b2d = prepare_classifier1d_params(weight, bias)
    w_t, b2d = jax.block_until_ready((w_t, b2d))

    y = classifier1d_forward(x, w_t, b2d)
    y = jax.block_until_ready(y)
    assert y.shape == (B, S, OUT)

    # Reference on the same precision path (bf16 inputs, f32 accumulation).
    y_ref = (
        jnp.dot(
            x.astype(jnp.bfloat16),
            weight.astype(jnp.bfloat16).T,
            preferred_element_type=jnp.float32,
        )
        + bias
    ).astype(x.dtype)
    assert jnp.allclose(y, y_ref, atol=5e-3, rtol=5e-3), float(
        jnp.max(jnp.abs(y - y_ref))
    )

    # Loose sanity check against the full-f32 linear.
    y_f32 = x @ weight.T + bias
    assert jnp.allclose(y, y_f32, atol=5e-2, rtol=5e-2)

    print("KERNEL_OK")
</pallas_src>

<mosaic_0001>
module attributes {stable_mosaic.version = 11 : i64} {
  func.func @_linear_bias_kernel(%arg0: i32, %arg1: i32, %arg2: memref<16x32xf32, #tpu.memory_space<vmem>>, %arg3: memref<32x128xbf16, #tpu.memory_space<vmem>>, %arg4: memref<1x128xf32, #tpu.memory_space<vmem>>, %arg5: memref<16x128xf32, #tpu.memory_space<vmem>>) attributes {dimension_semantics = [#tpu.dimension_semantics<parallel>, #tpu.dimension_semantics<parallel>], iteration_bounds = array<i64: 1, 1>, scalar_prefetch = 0 : i64, scratch_operands = 0 : i64, tpu.core_type = #tpu.core_type<tc>, window_params = [{transform_indices = @transform_0, window_bounds = array<i64: 16, 32>}, {transform_indices = @transform_1, window_bounds = array<i64: 32, 128>}, {transform_indices = @transform_2, window_bounds = array<i64: 1, 128>}, {transform_indices = @transform_3, window_bounds = array<i64: 16, 128>}]} {
    %c0 = arith.constant 0 : index
    %c0_0 = arith.constant 0 : index
    %0 = vector.load %arg2[%c0, %c0_0] : memref<16x32xf32, #tpu.memory_space<vmem>>, vector<16x32xf32>
    %1 = arith.truncf %0 : vector<16x32xf32> to vector<16x32xbf16>
    %c0_1 = arith.constant 0 : index
    %c0_2 = arith.constant 0 : index
    %2 = vector.load %arg3[%c0_1, %c0_2] : memref<32x128xbf16, #tpu.memory_space<vmem>>, vector<32x128xbf16>
    %cst = arith.constant dense<0.000000e+00> : vector<16x128xf32>
    %3 = tpu.matmul %1, %2, %cst {dimension_numbers = #tpu.dot_dimension_numbers<[1], [0], [0], [1], [0, 0, 1, 1], [], []>} : vector<16x32xbf16>, vector<32x128xbf16>, vector<16x128xf32> -> vector<16x128xf32>
    %c0_3 = arith.constant 0 : index
    %c0_4 = arith.constant 0 : index
    %4 = vector.load %arg4[%c0_3, %c0_4] : memref<1x128xf32, #tpu.memory_space<vmem>>, vector<1x128xf32>
    %5 = vector.broadcast %4 : vector<1x128xf32> to vector<16x128xf32>
    %6 = arith.addf %3, %5 : vector<16x128xf32>
    %c0_5 = arith.constant 0 : index
    %c0_6 = arith.constant 0 : index
    %7 = vector.load %arg5[%c0_5, %c0_6] : memref<16x128xf32, #tpu.memory_space<vmem>>, vector<16x128xf32>
    tpu.vector_store %arg5[%c0_5, %c0_6], %6 {strides = array<i32>} : memref<16x128xf32, #tpu.memory_space<vmem>>, vector<16x128xf32>,
    return
  }
  func.func @transform_0(%arg0: i32, %arg1: i32) -> (i32, i32) {
    %c0_i32 = arith.constant 0 : i32
    %c0_i32_0 = arith.constant 0 : i32
    return %arg0, %c0_i32 : i32, i32
  }
  func.func @transform_1(%arg0: i32, %arg1: i32) -> (i32, i32) {
    %c0_i32 = arith.constant 0 : i32
    %c0_i32_0 = arith.constant 0 : i32
    return %c0_i32, %arg1 : i32, i32
  }
  func.func @transform_2(%arg0: i32, %arg1: i32) -> (i32, i32) {
    %c0_i32 = arith.constant 0 : i32
    %c0_i32_0 = arith.constant 0 : i32
    return %c0_i32, %arg1 : i32, i32
  }
  func.func @transform_3(%arg0: i32, %arg1: i32) -> (i32, i32) {
    %c0_i32 = arith.constant 0 : i32
    return %arg0, %arg1 : i32, i32
  }
}

</mosaic_0001>

<llo_original>
// kernel: classifier1d_forward.1
$region0: #{classifier1d_forward.1}
  #allocation0 [shape = 'u32[]', space=smem, size = 0x4, offset = 0x4, fixed_abs, tag = 'smem constant byte address 0x4 - core index']
  #allocation1 [shape = 'u32[144,128]{1,0:T(1,128)}', space=vmem, size = 0x12000, scoped, tag = 'internal scratch']
  %s0 = inlined_call_operand.hbm [shape: f32[16,32], index: 0, kind: input, shape index: {}]
  %s1 = inlined_call_operand.hbm [shape: bf16[32,128], index: 1, kind: input, shape index: {}]
  %s2 = inlined_call_operand.vmem [shape: f32[1,128], index: 2, kind: input, shape index: {}]
  %s3 = inlined_call_operand.hbm [shape: f32[16,128], index: 3, kind: output, shape index: {}]
  %s4 = sld [smem:[#allocation0]]
  $region30: #{classifier1d_forward.1} parent=0
    _
  %s6 = ssub.s32 1, %s4
  %s7 = scalar_select 0, %s6, %s4
  $region1: #{classifier1d_forward.1} parent=0
    #allocation2 [shape = 'u8[8192]{0}', space=vmem, size = 0x2000, scoped, tag = 'input window, operand 0, single buffered']
    #allocation3 [shape = 's32[1]{0}', space=sflag, size = 0x4, scoped, tag = 'scoped memory for classifier1d_forward.1']
    #allocation4 [shape = 's32[1]{0}', space=sflag, size = 0x4, scoped, tag = 'scoped memory for classifier1d_forward.1']
    #allocation5 [shape = 'u8[8192]{0}', space=vmem, size = 0x2000, scoped, tag = 'input window, operand 1, single buffered']
    #allocation6 [shape = 's32[1]{0}', space=sflag, size = 0x4, scoped, tag = 'scoped memory for classifier1d_forward.1']
    #allocation7 [shape = 'u8[8192]{0}', space=vmem, size = 0x2000, scoped, tag = 'output window, operand 0, single buffered']
    %8 = vsyncpa [#allocation3], 0
    %9 = vsyncpa [#allocation6], 0
    %10 = vsyncpa [#allocation4], 0
    // Predicated region
    $region2: #{classifier1d_forward.1} parent=1 // pred_check
      _
    $region3: #{classifier1d_forward.1} parent=1 // pred_check_branch
      %12 = sbr.rel (0) target = $region5
    $region4: #{classifier1d_forward.1} parent=1 // pred_region
      %s14 = ssub.s32 256, 256
      %15 = vsyncadd [#allocation3], %s14
      %s16 = sshll.u32 [#allocation2], 4
      %s17 = int_to_ptr.vmem [resolvable:$true] %s16
      %22 = dma.hbm_to_vmem [thread:$0]  %s0, 256, %s17, [#allocation3], 128, 128, 8
    $region5: #{classifier1d_forward.1} parent=1 // pred_fallthru
      _
    // Predicated region
    $region6: #{classifier1d_forward.1} parent=1 // pred_check
      _
    $region7: #{classifier1d_forward.1} parent=1 // pred_check_branch
      %24 = sbr.rel (0) target = $region9
    $region8: #{classifier1d_forward.1} parent=1 // pred_region
      %s26 = ssub.s32 256, 256
      %27 = vsyncadd [#allocation6], %s26
      %s28 = sshll.u32 [#allocation5], 4
      %s29 = int_to_ptr.vmem [resolvable:$true] %s28
      %34 = dma.hbm_to_vmem [thread:$0]  %s1, 256, %s29, [#allocation6], 64, 64, 4
    $region9: #{classifier1d_forward.1} parent=1 // pred_fallthru
      _
    // Predicated region
    $region10: #{classifier1d_forward.1} parent=1 // pred_check
      _
    $region11: #{classifier1d_forward.1} parent=1 // pred_check_branch
      %36 = sbr.rel (0) target = $region13
    $region12: #{classifier1d_forward.1} parent=1 // pred_region
      _
    $region13: #{classifier1d_forward.1} parent=1 // pred_fallthru
      _
    // Predicated region
    $region14: #{classifier1d_forward.1} parent=1 // pred_check
      _
    $region15: #{classifier1d_forward.1} parent=1 // pred_check_branch
      %38 = sbr.rel (0) target = $region17
    $region16: #{classifier1d_forward.1} parent=1 // pred_region
      %39 = dma.done [#allocation3], 256
    $region17: #{classifier1d_forward.1} parent=1 // pred_fallthru
      _
    // Predicated region
    $region18: #{classifier1d_forward.1} parent=1 // pred_check
      _
    $region19: #{classifier1d_forward.1} parent=1 // pred_check_branch
      %41 = sbr.rel (0) target = $region21
    $region20: #{classifier1d_forward.1} parent=1 // pred_region
      %42 = dma.done [#allocation6], 256
    $region21: #{classifier1d_forward.1} parent=1 // pred_fallthru
      _
    %v44 = vld [vmem:[#allocation2] sm:$0xff]
    %v45 = vld [vmem:[#allocation2 + $0x8] sm:$0xff]
    %v46 = vpack.c.bf16 %v45, %v44
    %v47 = vld [vmem:[#allocation5] sm:$0xf]
    %v48 = vld [vmem:[#allocation5 + $0x4] sm:$0xf]
    %v49 = vld [vmem:[#allocation5 + $0x8] sm:$0xf]
    %v50 = vld [vmem:[#allocation5 + $0xc] sm:$0xf]
    %v51 = vld [vmem:[%s2] sm:$0x1]
    %v53 = vlaneseq
    %v54 = vshrl.u32 %v53, 7
    %v55 = vsub.s32 0, %v54
    %v56 = vrot.slane %v51, %v55
    %v62 = vunpack.c.l.b16 %v47
    %v63 = vunpack.c.l.b16 %v48
    %v64 = vunpack.c.l.b16 %v49
    %v65 = vunpack.c.l.b16 %v50
    %v66 = vpack.c.b16 %v63, %v62
    %v67 = vpack.c.b16 %v65, %v64
    %vm70 = vcmask 261120
    %v72 = vsel %vm70, %v46, 0
    %74 = vmatprep.subr.bf16.mxu0 0
    %75 = vmatpush1.bf16.msra.mxu0 %v66
    %76 = vmatprep.subr.bf16.mxu0 0
    %77 = vmatpush1.bf16.msra.mxu0 %v67
    %78 = vmatprep.subr.bf16.mxu0 0
    %79 = vmatpush1.bf16.msra.mxu0 0
    %80 = vmatprep.subr.bf16.mxu0 0
    %81 = vmatpush1.bf16.msra.mxu0 0
    %82 = vmatprep.subr.bf16.mxu0 0
    %83 = vmatpush1.bf16.msra.mxu0 0
    %84 = vmatprep.subr.bf16.mxu0 0
    %85 = vmatpush1.bf16.msra.mxu0 0
    %86 = vmatprep.subr.bf16.mxu0 0
    %87 = vmatpush1.bf16.msra.mxu0 0
    %88 = vmatprep.subr.bf16.mxu0 0
    %89 = vmatpush1.bf16.msra.mxu0 0
    %90 = vmatprep.subr.bf16.mxu0 0
    %91 = vmatpush1.bf16.msra.mxu0 0
    %92 = vmatprep.subr.bf16.mxu0 0
    %93 = vmatpush1.bf16.msra.mxu0 0
    %94 = vmatprep.subr.bf16.mxu0 0
    %95 = vmatpush1.bf16.msra.mxu0 0
    %96 = vmatprep.subr.bf16.mxu0 0
    %97 = vmatpush1.bf16.msra.mxu0 0
    %98 = vmatprep.subr.bf16.mxu0 0
    %99 = vmatpush1.bf16.msra.mxu0 0
    %100 = vmatprep.subr.bf16.mxu0 0
    %101 = vmatpush1.bf16.msra.mxu0 0
    %102 = vmatprep.subr.bf16.mxu0 0
    %103 = vmatpush1.bf16.msra.mxu0 0
    %104 = vmatprep.subr.bf16.mxu0 0
    %105 = vmatpush1.bf16.msra.mxu0 0
    %106 = vmatprep.mubr.bf16.mxu0 0
    %107 = vmatmul.mubr.bf16.gmra.mrb[0].mxu0 %v72
    %v108 = vpop.f32.mrb[0].mxu0
    %v109 = vadd.f32 %v56, %v108
    %v110 = vpop.f32.mrb[0].mxu0
    %v111 = vpop.f32.mrb[0].mxu0
    %v112 = vadd.f32 %v56, %v111
    %v113 = vpop.f32.mrb[0].mxu0
    %114 = vdwg.mxu0
    %115 = vst [vmem:[#allocation7] sm:$0xff] %v109
    %116 = vst [vmem:[#allocation7 + $0x8] sm:$0xff] %v112
    // Predicated region
    $region22: #{classifier1d_forward.1} parent=1 // pred_check
      _
    $region23: #{classifier1d_forward.1} parent=1 // pred_check_branch
      %118 = sbr.rel (0) target = $region25
    $region24: #{classifier1d_forward.1} parent=1 // pred_region
      %s120 = ssub.s32 256, 256
      %121 = vsyncadd [#allocation4], %s120
      %s122 = sshll.u32 [#allocation7], 4
      %s123 = int_to_ptr.vmem [resolvable:$true] %s122
      %128 = dma.vmem_to_hbm [thread:$0]  %s123, 256, %s3, [#allocation4], 128, 128, 8
    $region25: #{classifier1d_forward.1} parent=1 // pred_fallthru
      _
    // Predicated region
    $region26: #{classifier1d_forward.1} parent=1 // pred_check
      _
    $region27: #{classifier1d_forward.1} parent=1 // pred_check_branch
      %130 = sbr.rel (0) target = $region29
    $region28: #{classifier1d_forward.1} parent=1 // pred_region
      %131 = dma.done [#allocation4], 256
    $region29: #{classifier1d_forward.1} parent=1 // pred_fallthru
      _
    %132 = vsyncpa [#allocation3], 1
    %133 = vsyncpa [#allocation6], 1
    %134 = vsyncpa [#allocation4], 1

</llo_original>
